<compile_context>
chip_gen: v6e
topology: v6e:2x2x1
jax: 0.10.0
libtpu: 0.0.40
codegen_flags: <defaults>
</compile_context>

<pallas_src>
import jax
import jax.numpy as jnp
from jax.experimental import pallas as pl
from jax.experimental.pallas import tpu as pltpu

LANE = 128  # TPU lane width


def _round_up(x, m):
    return ((x + m - 1) // m) * m


def _dqn_kernel(x_ref, w1_ref, b1_ref, w2_ref, b2_ref, w3_ref, b3_ref, o_ref):
    # One (tb, input_dims) tile of states; weights fully VMEM-resident.
    # MXU: bf16 x bf16 -> f32 accumulate.  VPU: f32 bias add + ReLU.
    x = x_ref[...].astype(jnp.bfloat16)                                   # f32 -> bf16 in-register
    h1 = jnp.dot(x, w1_ref[...], preferred_element_type=jnp.float32) + b1_ref[...]
    h1 = jnp.maximum(h1, 0.0).astype(jnp.bfloat16)
    h2 = jnp.dot(h1, w2_ref[...], preferred_element_type=jnp.float32) + b2_ref[...]
    h2 = jnp.maximum(h2, 0.0).astype(jnp.bfloat16)
    out = jnp.dot(h2, w3_ref[...], preferred_element_type=jnp.float32) + b3_ref[...]
    o_ref[...] = out.astype(o_ref.dtype)                                  # true-width (tb, n_actions) store


def prepare_params(w1, b1, w2, b2, w3, b3):
    """Pad only the hidden (interior MXU K/N) dims to a multiple of 128 and pre-cast
    weights to bf16.  Input dim (w1 K) and output dim (w3 N) stay at true width.
    Zero padding is semantics-preserving: padded hidden units get zero weights and
    bias 0 -> ReLU(0) = 0 -> multiply zero downstream rows -> contribute nothing."""
    h1, h2 = w1.shape[1], w2.shape[1]
    h1p, h2p = _round_up(h1, LANE), _round_up(h2, LANE)

    w1p = jnp.pad(w1, ((0, 0), (0, h1p - h1))).astype(jnp.bfloat16)
    b1p = jnp.pad(b1.reshape(1, -1), ((0, 0), (0, h1p - h1))).astype(jnp.float32)
    w2p = jnp.pad(w2, ((0, h1p - h1), (0, h2p - h2))).astype(jnp.bfloat16)
    b2p = jnp.pad(b2.reshape(1, -1), ((0, 0), (0, h2p - h2))).astype(jnp.float32)
    w3p = jnp.pad(w3, ((0, h2p - h2), (0, 0))).astype(jnp.bfloat16)
    b3p = b3.reshape(1, -1).astype(jnp.float32)
    return w1p, b1p, w2p, b2p, w3p, b3p


def deep_q_net_forward(x, params, *, tile_b=2048):
    """x: (B, input_dims) f32.  params: output of prepare_params.
    Returns (B, n_actions) f32 Q-values."""
    w1, b1, w2, b2, w3, b3 = params
    B, in_dim = x.shape
    assert w1.shape[0] == in_dim, "input_dims mismatch with prepared params"
    h1_p = w1.shape[1]
    h2_p = w2.shape[1]
    n_actions = w3.shape[1]

    # Batch tile: multiple of 16 (clean bf16 sublane packing).  No padding of x;
    # a ragged final grid block is masked by Pallas (rows are independent).
    tb = _round_up(max(1, min(tile_b, B)), 16)
    # v7x: with a "parallel" batch axis, >=2 grid steps let both TensorCores work.
    if B >= 256 and tb >= B:
        tb = _round_up(pl.cdiv(B, 2), 16)
    if tb >= B:
        tb = B  # single full-batch block (full-array-dim exception; no OOB rows)
    grid = (pl.cdiv(B, tb),)

    # Cost estimate from the post-optimization (actually-accessed) shapes.
    flops = 2 * B * (in_dim * h1_p + h1_p * h2_p + h2_p * n_actions)
    bytes_accessed = (
        B * in_dim * 4                                   # x (f32, true width)
        + (w1.size + w2.size + w3.size) * 2              # weights (bf16)
        + (b1.size + b2.size + b3.size) * 4              # biases (f32)
        + B * n_actions * 4                              # output (f32, true width)
    )

    out = pl.pallas_call(
        _dqn_kernel,
        out_shape=jax.ShapeDtypeStruct((B, n_actions), jnp.float32),
        grid=grid,
        in_specs=[
            pl.BlockSpec((tb, in_dim), lambda i: (i, 0)),   # x tile: true feature width
            pl.BlockSpec((in_dim, h1_p), lambda i: (0, 0)),  # weights: constant block ->
            pl.BlockSpec((1, h1_p), lambda i: (0, 0)),       #   fetched once, VMEM-resident
            pl.BlockSpec((h1_p, h2_p), lambda i: (0, 0)),
            pl.BlockSpec((1, h2_p), lambda i: (0, 0)),
            pl.BlockSpec((h2_p, n_actions), lambda i: (0, 0)),
            pl.BlockSpec((1, n_actions), lambda i: (0, 0)),
        ],
        out_specs=pl.BlockSpec((tb, n_actions), lambda i: (i, 0)),
        compiler_params=pltpu.CompilerParams(dimension_semantics=("parallel",)),
        cost_estimate=pl.CostEstimate(
            flops=flops, transcendentals=0, bytes_accessed=bytes_accessed
        ),
    )(x, w1, b1, w2, b2, w3, b3)

    # TODO(synk): if called every RL step with tiny batches, the call is dispatch /
    # DMA-setup bound; keep weights resident across calls via a cross-pallas_call
    # prefetch (P10) or batch several env states per forward.
    return out


def init_params(key, input_dims, hidden1_dims, hidden2_dims, n_actions):
    """PyTorch nn.Linear-style init (uniform +-1/sqrt(fan_in)).
    Weights returned as (in, out) so the kernel computes x @ W + b."""
    ks = jax.random.split(key, 6)

    def linear(kw, kb, fan_in, fan_out):
        bound = 1.0 / jnp.sqrt(jnp.float32(fan_in))
        w = jax.random.uniform(kw, (fan_in, fan_out), jnp.float32, -bound, bound)
        b = jax.random.uniform(kb, (1, fan_out), jnp.float32, -bound, bound)
        return w, b

    w1, b1 = linear(ks[0], ks[1], input_dims, hidden1_dims)
    w2, b2 = linear(ks[2], ks[3], hidden1_dims, hidden2_dims)
    w3, b3 = linear(ks[4], ks[5], hidden2_dims, n_actions)
    return w1, b1, w2, b2, w3, b3


if __name__ == "__main__":
    # Small shapes consistent with the module's forward.
    batch = 8
    input_dims = 16
    hidden1_dims = 32
    hidden2_dims = 32
    n_actions = 8

    key = jax.random.PRNGKey(0)
    k_params, k_x, k_x2 = jax.random.split(key, 3)
    raw = init_params(k_params, input_dims, hidden1_dims, hidden2_dims, n_actions)
    params = prepare_params(*raw)

    fwd = jax.jit(deep_q_net_forward, static_argnames=("tile_b",))

    # Matched-math reference (same bf16 matmul / f32 accumulate path, same padded params).
    def ref_fwd(x):
        w1p, b1p, w2p, b2p, w3p, b3p = params
        xb = x.astype(jnp.bfloat16)
        h1 = jnp.maximum(
            jnp.dot(xb, w1p, preferred_element_type=jnp.float32) + b1p, 0.0
        ).astype(jnp.bfloat16)
        h2 = jnp.maximum(
            jnp.dot(h1, w2p, preferred_element_type=jnp.float32) + b2p, 0.0
        ).astype(jnp.bfloat16)
        return jnp.dot(h2, w3p, preferred_element_type=jnp.float32) + b3p

    # 1) Tiny batch (single grid step, full-batch block).
    state = jax.random.normal(k_x, (batch, input_dims), jnp.float32)
    out = jax.block_until_ready(fwd(state, params))
    assert out.shape == (batch, n_actions)
    assert jnp.allclose(out, ref_fwd(state), atol=1e-3, rtol=1e-3), "mismatch vs bf16 reference"

    # Sanity vs original f32 module semantics (bf16 forward tolerance).
    w1, b1, w2, b2, w3, b3 = raw
    h1 = jnp.maximum(state @ w1 + b1, 0.0)
    h2 = jnp.maximum(h1 @ w2 + b2, 0.0)
    ref_f32 = h2 @ w3 + b3
    assert jnp.allclose(out, ref_f32, atol=5e-2, rtol=5e-2), "mismatch vs f32 reference"

    # 2) Non-multiple batch exercising the multi-step grid + ragged final block.
    state2 = jax.random.normal(k_x2, (300, input_dims), jnp.float32)
    out2 = jax.block_until_ready(fwd(state2, params, tile_b=128))
    assert out2.shape == (300, n_actions)
    assert jnp.allclose(out2, ref_fwd(state2), atol=1e-3, rtol=1e-3), "mismatch (batched, tile 128)"

    # 3) Default large tile path (single call, v7x split logic exercised since B >= 256).
    out3 = jax.block_until_ready(fwd(state2, params))
    assert out3.shape == (300, n_actions)
    assert jnp.allclose(out3, ref_fwd(state2), atol=1e-3, rtol=1e-3), "mismatch (batched, default tile)"

    print("KERNEL_OK")
</pallas_src>

<mosaic_0001>
module attributes {stable_mosaic.version = 11 : i64} {
  func.func @_dqn_kernel(%arg0: i32, %arg1: memref<8x16xf32, #tpu.memory_space<vmem>>, %arg2: memref<16x128xbf16, #tpu.memory_space<vmem>>, %arg3: memref<1x128xf32, #tpu.memory_space<vmem>>, %arg4: memref<128x128xbf16, #tpu.memory_space<vmem>>, %arg5: memref<1x128xf32, #tpu.memory_space<vmem>>, %arg6: memref<128x8xbf16, #tpu.memory_space<vmem>>, %arg7: memref<1x8xf32, #tpu.memory_space<vmem>>, %arg8: memref<8x8xf32, #tpu.memory_space<vmem>>) attributes {dimension_semantics = [#tpu.dimension_semantics<parallel>], iteration_bounds = array<i64: 1>, scalar_prefetch = 0 : i64, scratch_operands = 0 : i64, tpu.core_type = #tpu.core_type<tc>, window_params = [{transform_indices = @transform_0, window_bounds = array<i64: 8, 16>}, {pipeline_mode = #tpu.pipeline_mode<synchronous>, transform_indices = @transform_1, window_bounds = array<i64: 16, 128>}, {pipeline_mode = #tpu.pipeline_mode<synchronous>, transform_indices = @transform_2, window_bounds = array<i64: 1, 128>}, {pipeline_mode = #tpu.pipeline_mode<synchronous>, transform_indices = @transform_3, window_bounds = array<i64: 128, 128>}, {pipeline_mode = #tpu.pipeline_mode<synchronous>, transform_indices = @transform_4, window_bounds = array<i64: 1, 128>}, {pipeline_mode = #tpu.pipeline_mode<synchronous>, transform_indices = @transform_5, window_bounds = array<i64: 128, 8>}, {pipeline_mode = #tpu.pipeline_mode<synchronous>, transform_indices = @transform_6, window_bounds = array<i64: 1, 8>}, {transform_indices = @transform_7, window_bounds = array<i64: 8, 8>}]} {
    %c0 = arith.constant 0 : index
    %c0_0 = arith.constant 0 : index
    %0 = vector.load %arg1[%c0, %c0_0] : memref<8x16xf32, #tpu.memory_space<vmem>>, vector<8x16xf32>
    %1 = arith.truncf %0 : vector<8x16xf32> to vector<8x16xbf16>
    %c0_1 = arith.constant 0 : index
    %c0_2 = arith.constant 0 : index
    %2 = vector.load %arg2[%c0_1, %c0_2] : memref<16x128xbf16, #tpu.memory_space<vmem>>, vector<16x128xbf16>
    %cst = arith.constant dense<0.000000e+00> : vector<8x128xf32>
    %3 = tpu.matmul %1, %2, %cst {dimension_numbers = #tpu.dot_dimension_numbers<[1], [0], [0], [1], [0, 0, 1, 1], [], []>} : vector<8x16xbf16>, vector<16x128xbf16>, vector<8x128xf32> -> vector<8x128xf32>
    %c0_3 = arith.constant 0 : index
    %c0_4 = arith.constant 0 : index
    %4 = vector.load %arg3[%c0_3, %c0_4] : memref<1x128xf32, #tpu.memory_space<vmem>>, vector<1x128xf32>
    %5 = vector.broadcast %4 : vector<1x128xf32> to vector<8x128xf32>
    %6 = arith.addf %3, %5 : vector<8x128xf32>
    %cst_5 = arith.constant 0.000000e+00 : f32
    %7 = vector.broadcast %cst_5 : f32 to vector<8x128xf32>
    %8 = arith.maximumf %6, %7 : vector<8x128xf32>
    %9 = arith.truncf %8 : vector<8x128xf32> to vector<8x128xbf16>
    %c0_6 = arith.constant 0 : index
    %c0_7 = arith.constant 0 : index
    %10 = vector.load %arg4[%c0_6, %c0_7] : memref<128x128xbf16, #tpu.memory_space<vmem>>, vector<128x128xbf16>
    %cst_8 = arith.constant dense<0.000000e+00> : vector<8x128xf32>
    %11 = tpu.matmul %9, %10, %cst_8 {dimension_numbers = #tpu.dot_dimension_numbers<[1], [0], [0], [1], [0, 0, 1, 1], [], []>} : vector<8x128xbf16>, vector<128x128xbf16>, vector<8x128xf32> -> vector<8x128xf32>
    %c0_9 = arith.constant 0 : index
    %c0_10 = arith.constant 0 : index
    %12 = vector.load %arg5[%c0_9, %c0_10] : memref<1x128xf32, #tpu.memory_space<vmem>>, vector<1x128xf32>
    %13 = vector.broadcast %12 : vector<1x128xf32> to vector<8x128xf32>
    %14 = arith.addf %11, %13 : vector<8x128xf32>
    %cst_11 = arith.constant 0.000000e+00 : f32
    %15 = vector.broadcast %cst_11 : f32 to vector<8x128xf32>
    %16 = arith.maximumf %14, %15 : vector<8x128xf32>
    %17 = arith.truncf %16 : vector<8x128xf32> to vector<8x128xbf16>
    %c0_12 = arith.constant 0 : index
    %c0_13 = arith.constant 0 : index
    %18 = vector.load %arg6[%c0_12, %c0_13] : memref<128x8xbf16, #tpu.memory_space<vmem>>, vector<128x8xbf16>
    %cst_14 = arith.constant dense<0.000000e+00> : vector<8x8xf32>
    %19 = tpu.matmul %17, %18, %cst_14 {dimension_numbers = #tpu.dot_dimension_numbers<[1], [0], [0], [1], [0, 0, 1, 1], [], []>} : vector<8x128xbf16>, vector<128x8xbf16>, vector<8x8xf32> -> vector<8x8xf32>
    %c0_15 = arith.constant 0 : index
    %c0_16 = arith.constant 0 : index
    %20 = vector.load %arg7[%c0_15, %c0_16] : memref<1x8xf32, #tpu.memory_space<vmem>>, vector<1x8xf32>
    %21 = vector.broadcast %20 : vector<1x8xf32> to vector<8x8xf32>
    %22 = arith.addf %19, %21 : vector<8x8xf32>
    %c0_17 = arith.constant 0 : index
    %c0_18 = arith.constant 0 : index
    %23 = vector.load %arg8[%c0_17, %c0_18] : memref<8x8xf32, #tpu.memory_space<vmem>>, vector<8x8xf32>
    tpu.vector_store %arg8[%c0_17, %c0_18], %22 {strides = array<i32>} : memref<8x8xf32, #tpu.memory_space<vmem>>, vector<8x8xf32>,
    return
  }
  func.func @transform_0(%arg0: i32) -> (i32, i32) {
    %c0_i32 = arith.constant 0 : i32
    %c0_i32_0 = arith.constant 0 : i32
    return %arg0, %c0_i32 : i32, i32
  }
  func.func @transform_1(%arg0: i32) -> (i32, i32) {
    %c0_i32 = arith.constant 0 : i32
    %c0_i32_0 = arith.constant 0 : i32
    %c0_i32_1 = arith.constant 0 : i32
    return %c0_i32, %c0_i32_0 : i32, i32
  }
  func.func @transform_2(%arg0: i32) -> (i32, i32) {
    %c0_i32 = arith.constant 0 : i32
    %c0_i32_0 = arith.constant 0 : i32
    %c0_i32_1 = arith.constant 0 : i32
    return %c0_i32, %c0_i32_0 : i32, i32
  }
  func.func @transform_3(%arg0: i32) -> (i32, i32) {
    %c0_i32 = arith.constant 0 : i32
    %c0_i32_0 = arith.constant 0 : i32
    %c0_i32_1 = arith.constant 0 : i32
    return %c0_i32, %c0_i32_0 : i32, i32
  }
  func.func @transform_4(%arg0: i32) -> (i32, i32) {
    %c0_i32 = arith.constant 0 : i32
    %c0_i32_0 = arith.constant 0 : i32
    %c0_i32_1 = arith.constant 0 : i32
    return %c0_i32, %c0_i32_0 : i32, i32
  }
  func.func @transform_5(%arg0: i32) -> (i32, i32) {
    %c0_i32 = arith.constant 0 : i32
    %c0_i32_0 = arith.constant 0 : i32
    %c0_i32_1 = arith.constant 0 : i32
    return %c0_i32, %c0_i32_0 : i32, i32
  }
  func.func @transform_6(%arg0: i32) -> (i32, i32) {
    %c0_i32 = arith.constant 0 : i32
    %c0_i32_0 = arith.constant 0 : i32
    %c0_i32_1 = arith.constant 0 : i32
    return %c0_i32, %c0_i32_0 : i32, i32
  }
  func.func @transform_7(%arg0: i32) -> (i32, i32) {
    %c0_i32 = arith.constant 0 : i32
    %c0_i32_0 = arith.constant 0 : i32
    return %arg0, %c0_i32 : i32, i32
  }
}

</mosaic_0001>

<llo_original>
// kernel: deep_q_net_forward.1
$region0: #{deep_q_net_forward.1}
  #allocation0 [shape = 'u32[]', space=smem, size = 0x4, offset = 0x4, fixed_abs, tag = 'smem constant byte address 0x4 - core index']
  #allocation1 [shape = 'u32[144,128]{1,0:T(1,128)}', space=vmem, size = 0x12000, scoped, tag = 'internal scratch']
  %s0 = inlined_call_operand.vmem [shape: f32[8,16], index: 0, kind: input, shape index: {}]
  %s1 = inlined_call_operand.hbm [shape: bf16[16,128], index: 1, kind: input, shape index: {}]
  %s2 = inlined_call_operand.vmem [shape: f32[1,128], index: 2, kind: input, shape index: {}]
  %s3 = inlined_call_operand.vmem [shape: bf16[128,128], index: 3, kind: input, shape index: {}]
  %s4 = inlined_call_operand.hbm [shape: f32[1,128], index: 4, kind: input, shape index: {}]
  %s5 = inlined_call_operand.vmem [shape: bf16[128,8], index: 5, kind: input, shape index: {}]
  %s6 = inlined_call_operand.vmem [shape: f32[1,8], index: 6, kind: input, shape index: {}]
  %s7 = inlined_call_operand.hbm [shape: f32[8,8], index: 7, kind: output, shape index: {}]
  %s8 = sld [smem:[#allocation0]]
  $region46: #{deep_q_net_forward.1} parent=0
    _
  %s10 = ssub.s32 1, %s8
  %s11 = scalar_select 0, %s10, %s8
  $region1: #{deep_q_net_forward.1} parent=0
    #allocation2 [shape = 'u8[4096]{0}', space=vmem, size = 0x1000, scoped, tag = 'input window, operand 1, single buffered']
    #allocation3 [shape = 's32[1]{0}', space=sflag, size = 0x4, scoped, tag = 'scoped memory for deep_q_net_forward.1']
    #allocation4 [shape = 's32[1]{0}', space=sflag, size = 0x4, scoped, tag = 'scoped memory for deep_q_net_forward.1']
    #allocation5 [shape = 'u8[512]{0}', space=vmem, size = 0x400, scoped, tag = 'input window, operand 4, single buffered']
    #allocation6 [shape = 's32[1]{0}', space=sflag, size = 0x4, scoped, tag = 'scoped memory for deep_q_net_forward.1']
    #allocation7 [shape = 'u8[4096]{0}', space=vmem, size = 0x1000, scoped, tag = 'output window, operand 0, single buffered']
    %12 = vsyncpa [#allocation3], 0
    %13 = vsyncpa [#allocation6], 0
    %14 = vsyncpa [#allocation4], 0
    // Predicated region
    $region2: #{deep_q_net_forward.1} parent=1 // pred_check
      _
    $region3: #{deep_q_net_forward.1} parent=1 // pred_check_branch
      %16 = sbr.rel (0) target = $region5
    $region4: #{deep_q_net_forward.1} parent=1 // pred_region
      _
    $region5: #{deep_q_net_forward.1} parent=1 // pred_fallthru
      _
    // Predicated region
    $region6: #{deep_q_net_forward.1} parent=1 // pred_check
      _
    $region7: #{deep_q_net_forward.1} parent=1 // pred_check_branch
      %18 = sbr.rel (0) target = $region9
    $region8: #{deep_q_net_forward.1} parent=1 // pred_region
      %s20 = ssub.s32 128, 128
      %21 = vsyncadd [#allocation3], %s20
      %s22 = sshll.u32 [#allocation2], 4
      %s23 = int_to_ptr.vmem [resolvable:$true] %s22
      %28 = dma.hbm_to_vmem [thread:$0]  %s1, 128, %s23, [#allocation3], 64, 64, 4
    $region9: #{deep_q_net_forward.1} parent=1 // pred_fallthru
      _
    // Predicated region
    $region10: #{deep_q_net_forward.1} parent=1 // pred_check
      _
    $region11: #{deep_q_net_forward.1} parent=1 // pred_check_branch
      %30 = sbr.rel (0) target = $region13
    $region12: #{deep_q_net_forward.1} parent=1 // pred_region
      _
    $region13: #{deep_q_net_forward.1} parent=1 // pred_fallthru
      _
    // Predicated region
    $region14: #{deep_q_net_forward.1} parent=1 // pred_check
      _
    $region15: #{deep_q_net_forward.1} parent=1 // pred_check_branch
      %32 = sbr.rel (0) target = $region17
    $region16: #{deep_q_net_forward.1} parent=1 // pred_region
      _
    $region17: #{deep_q_net_forward.1} parent=1 // pred_fallthru
      _
    // Predicated region
    $region18: #{deep_q_net_forward.1} parent=1 // pred_check
      _
    $region19: #{deep_q_net_forward.1} parent=1 // pred_check_branch
      %34 = sbr.rel (0) target = $region21
    $region20: #{deep_q_net_forward.1} parent=1 // pred_region
      %s36 = ssub.s32 16, 16
      %37 = vsyncadd [#allocation6], %s36
      %s39 = sshll.u32 [#allocation5], 4
      %s40 = int_to_ptr.vmem [resolvable:$true] %s39
      %42 = dma.hbm_to_vmem [thread:$0]  %s4, 16, %s40, [#allocation6]
    $region21: #{deep_q_net_forward.1} parent=1 // pred_fallthru
      _
    // Predicated region
    $region22: #{deep_q_net_forward.1} parent=1 // pred_check
      _
    $region23: #{deep_q_net_forward.1} parent=1 // pred_check_branch
      %44 = sbr.rel (0) target = $region25
    $region24: #{deep_q_net_forward.1} parent=1 // pred_region
      _
    $region25: #{deep_q_net_forward.1} parent=1 // pred_fallthru
      _
    // Predicated region
    $region26: #{deep_q_net_forward.1} parent=1 // pred_check
      _
    $region27: #{deep_q_net_forward.1} parent=1 // pred_check_branch
      %46 = sbr.rel (0) target = $region29
    $region28: #{deep_q_net_forward.1} parent=1 // pred_region
      _
    $region29: #{deep_q_net_forward.1} parent=1 // pred_fallthru
      _
    // Predicated region
    $region30: #{deep_q_net_forward.1} parent=1 // pred_check
      _
    $region31: #{deep_q_net_forward.1} parent=1 // pred_check_branch
      %48 = sbr.rel (0) target = $region33
    $region32: #{deep_q_net_forward.1} parent=1 // pred_region
      %49 = dma.done [#allocation3], 128
    $region33: #{deep_q_net_forward.1} parent=1 // pred_fallthru
      _
    // Predicated region
    $region34: #{deep_q_net_forward.1} parent=1 // pred_check
      _
    $region35: #{deep_q_net_forward.1} parent=1 // pred_check_branch
      %51 = sbr.rel (0) target = $region37
    $region36: #{deep_q_net_forward.1} parent=1 // pred_region
      %52 = dma.done [#allocation6], 16
    $region37: #{deep_q_net_forward.1} parent=1 // pred_fallthru
      _
    %v54 = vld [vmem:[%s0] sm:$0xff]
    %v55 = vpack.c.bf16 %v54, %v54
    %v56 = vld [vmem:[#allocation2] sm:$0xf]
    %v57 = vld [vmem:[#allocation2 + $0x4] sm:$0xf]
    %v58 = vld [vmem:[%s2] sm:$0x1]
    %v60 = vlaneseq
    %v61 = vshrl.u32 %v60, 7
    %v62 = vsub.s32 0, %v61
    %v63 = vrot.slane %v58, %v62
    %v67 = vunpack.c.l.b16 %v56
    %v68 = vunpack.c.l.b16 %v57
    %v69 = vpack.c.b16 %v68, %v67
    %vm71 = vcmask 130048
    %v73 = vsel %vm71, %v55, 0
    %75 = vmatprep.subr.bf16.mxu0 0
    %76 = vmatpush1.bf16.msra.mxu0 0
    %77 = vmatprep.subr.bf16.mxu0 0
    %78 = vmatpush1.bf16.msra.mxu0 0
    %79 = vmatprep.subr.bf16.mxu0 0
    %80 = vmatpush1.bf16.msra.mxu0 0
    %81 = vmatprep.subr.bf16.mxu0 0
    %82 = vmatpush1.bf16.msra.mxu0 0
    %83 = vmatprep.subr.bf16.mxu0 0
    %84 = vmatpush1.bf16.msra.mxu0 0
    %85 = vmatprep.subr.bf16.mxu0 0
    %86 = vmatpush1.bf16.msra.mxu0 0
    %87 = vmatprep.subr.bf16.mxu0 0
    %88 = vmatpush1.bf16.msra.mxu0 0
    %89 = vmatprep.subr.bf16.mxu0 0
    %90 = vmatpush1.bf16.msra.mxu0 %v69
    %91 = vmatprep.subr.bf16.mxu0 0
    %92 = vmatpush2.bf16.msra.mxu0 0
    %93 = vmatprep.subr.bf16.mxu0 0
    %94 = vmatpush2.bf16.msra.mxu0 0
    %95 = vmatprep.subr.bf16.mxu0 0
    %96 = vmatpush2.bf16.msra.mxu0 0
    %97 = vmatprep.subr.bf16.mxu0 0
    %98 = vmatpush2.bf16.msra.mxu0 0
    %99 = vmatprep.subr.bf16.mxu0 0
    %100 = vmatpush2.bf16.msra.mxu0 0
    %101 = vmatprep.subr.bf16.mxu0 0
    %102 = vmatpush2.bf16.msra.mxu0 0
    %103 = vmatprep.subr.bf16.mxu0 0
    %104 = vmatpush2.bf16.msra.mxu0 0
    %105 = vmatprep.subr.bf16.mxu0 0
    %106 = vmatpush2.bf16.msra.mxu0 0
    %107 = vmatprep.mubr.bf16.mxu0 0
    %108 = vmatmul.mubr.bf16.gmra.mxu0 %v73
    %v109 = vpop.f32.mrf.mxu0
    %v110 = vadd.f32 %v63, %v109
    %v111 = vpop.f32.mrf.mxu0
    %v112 = vpop.f32.mrf.mxu0
    %v113 = vpop.f32.mrf.mxu0
    %114 = vdwg.mxu0
    %v115 = vmax.f32 %v110, 0.0
    %v116 = vpack.c.bf16 %v115, %v115
    %v117 = vld [vmem:[%s3] sm:$0xf]
    %v118 = vld [vmem:[%s3 + $0x4] sm:$0xf]
    %v119 = vld [vmem:[%s3 + $0x8] sm:$0xf]
    %v120 = vld [vmem:[%s3 + $0xc] sm:$0xf]
    %v121 = vld [vmem:[%s3 + $0x10] sm:$0xf]
    %v122 = vld [vmem:[%s3 + $0x14] sm:$0xf]
    %v123 = vld [vmem:[%s3 + $0x18] sm:$0xf]
    %v124 = vld [vmem:[%s3 + $0x1c] sm:$0xf]
    %v125 = vld [vmem:[%s3 + $0x20] sm:$0xf]
    %v126 = vld [vmem:[%s3 + $0x24] sm:$0xf]
    %v127 = vld [vmem:[%s3 + $0x28] sm:$0xf]
    %v128 = vld [vmem:[%s3 + $0x2c] sm:$0xf]
    %v129 = vld [vmem:[%s3 + $0x30] sm:$0xf]
    %v130 = vld [vmem:[%s3 + $0x34] sm:$0xf]
    %v131 = vld [vmem:[%s3 + $0x38] sm:$0xf]
    %v132 = vld [vmem:[%s3 + $0x3c] sm:$0xf]
    %v133 = vld [vmem:[#allocation5] sm:$0x1]
    %v135 = vlaneseq
    %v136 = vshrl.u32 %v135, 7
    %v137 = vsub.s32 0, %v136
    %v138 = vrot.slane %v133, %v137
    %v156 = vunpack.c.l.b16 %v117
    %v157 = vunpack.c.l.b16 %v118
    %v158 = vunpack.c.l.b16 %v119
    %v159 = vunpack.c.l.b16 %v120
    %v160 = vunpack.c.l.b16 %v121
    %v161 = vunpack.c.l.b16 %v122
    %v162 = vunpack.c.l.b16 %v123
    %v163 = vunpack.c.l.b16 %v124
    %v164 = vunpack.c.l.b16 %v125
    %v165 = vunpack.c.l.b16 %v126
    %v166 = vunpack.c.l.b16 %v127
    %v167 = vunpack.c.l.b16 %v128
    %v168 = vunpack.c.l.b16 %v129
    %v169 = vunpack.c.l.b16 %v130
    %v170 = vunpack.c.l.b16 %v131
    %v171 = vunpack.c.l.b16 %v132
    %v172 = vpack.c.b16 %v157, %v156
    %v173 = vpack.c.b16 %v159, %v158
    %v174 = vpack.c.b16 %v161, %v160
    %v175 = vpack.c.b16 %v163, %v162
    %v176 = vpack.c.b16 %v165, %v164
    %v177 = vpack.c.b16 %v167, %v166
    %v178 = vpack.c.b16 %v169, %v168
    %v179 = vpack.c.b16 %v171, %v170
    %188 = vmatprep.subr.bf16.mxu0 0
    %189 = vmatpush1.bf16.msra.mxu0 %v179
    %190 = vmatprep.subr.bf16.mxu0 0
    %191 = vmatpush1.bf16.msra.mxu0 %v178
    %192 = vmatprep.subr.bf16.mxu0 0
    %193 = vmatpush1.bf16.msra.mxu0 %v177
    %194 = vmatprep.subr.bf16.mxu0 0
    %195 = vmatpush1.bf16.msra.mxu0 %v176
    %196 = vmatprep.subr.bf16.mxu0 0
    %197 = vmatpush1.bf16.msra.mxu0 %v175
    %198 = vmatprep.subr.bf16.mxu0 0
    %199 = vmatpush1.bf16.msra.mxu0 %v174
    %200 = vmatprep.subr.bf16.mxu0 0
    %201 = vmatpush1.bf16.msra.mxu0 %v173
    %202 = vmatprep.subr.bf16.mxu0 0
    %203 = vmatpush1.bf16.msra.mxu0 %v172
    %204 = vmatprep.subr.bf16.mxu0 0
    %205 = vmatpush2.bf16.msra.mxu0 0
    %206 = vmatprep.subr.bf16.mxu0 0
    %207 = vmatpush2.bf16.msra.mxu0 0
    %208 = vmatprep.subr.bf16.mxu0 0
    %209 = vmatpush2.bf16.msra.mxu0 0
    %210 = vmatprep.subr.bf16.mxu0 0
    %211 = vmatpush2.bf16.msra.mxu0 0
    %212 = vmatprep.subr.bf16.mxu0 0
    %213 = vmatpush2.bf16.msra.mxu0 0
    %214 = vmatprep.subr.bf16.mxu0 0
    %215 = vmatpush2.bf16.msra.mxu0 0
    %216 = vmatprep.subr.bf16.mxu0 0
    %217 = vmatpush2.bf16.msra.mxu0 0
    %218 = vmatprep.subr.bf16.mxu0 0
    %219 = vmatpush2.bf16.msra.mxu0 0
    %220 = vmatprep.mubr.bf16.mxu0 0
    %221 = vmatmul.mubr.bf16.gmra.mxu0 %v116
    %v222 = vpop.f32.mrf.mxu0
    %v223 = vadd.f32 %v138, %v222
    %v224 = vpop.f32.mrf.mxu0
    %v225 = vpop.f32.mrf.mxu0
    %v226 = vpop.f32.mrf.mxu0
    %227 = vdwg.mxu0
    %v228 = vmax.f32 %v223, 0.0
    %v229 = vpack.c.bf16 %v228, %v228
    %v230 = vld [vmem:[%s5] sm:$0xf]
    %v231 = vld [vmem:[%s5 + $0x4] sm:$0xf]
    %v232 = vld [vmem:[%s5 + $0x8] sm:$0xf]
    %v233 = vld [vmem:[%s5 + $0xc] sm:$0xf]
    %v234 = vld [vmem:[%s5 + $0x10] sm:$0xf]
    %v235 = vld [vmem:[%s5 + $0x14] sm:$0xf]
    %v236 = vld [vmem:[%s5 + $0x18] sm:$0xf]
    %v237 = vld [vmem:[%s5 + $0x1c] sm:$0xf]
    %v238 = vld [vmem:[%s5 + $0x20] sm:$0xf]
    %v239 = vld [vmem:[%s5 + $0x24] sm:$0xf]
    %v240 = vld [vmem:[%s5 + $0x28] sm:$0xf]
    %v241 = vld [vmem:[%s5 + $0x2c] sm:$0xf]
    %v242 = vld [vmem:[%s5 + $0x30] sm:$0xf]
    %v243 = vld [vmem:[%s5 + $0x34] sm:$0xf]
    %v244 = vld [vmem:[%s5 + $0x38] sm:$0xf]
    %v245 = vld [vmem:[%s5 + $0x3c] sm:$0xf]
    %v246 = vld [vmem:[%s6] sm:$0x1]
    %v248 = vlaneseq
    %v249 = vshrl.u32 %v248, 7
    %v250 = vsub.s32 0, %v249
    %v251 = vrot.slane %v246, %v250
    %v269 = vunpack.c.l.b16 %v230
    %v270 = vunpack.c.l.b16 %v231
    %v271 = vunpack.c.l.b16 %v232
    %v272 = vunpack.c.l.b16 %v233
    %v273 = vunpack.c.l.b16 %v234
    %v274 = vunpack.c.l.b16 %v235
    %v275 = vunpack.c.l.b16 %v236
    %v276 = vunpack.c.l.b16 %v237
    %v277 = vunpack.c.l.b16 %v238
    %v278 = vunpack.c.l.b16 %v239
    %v279 = vunpack.c.l.b16 %v240
    %v280 = vunpack.c.l.b16 %v241
    %v281 = vunpack.c.l.b16 %v242
    %v282 = vunpack.c.l.b16 %v243
    %v283 = vunpack.c.l.b16 %v244
    %v284 = vunpack.c.l.b16 %v245
    %v285 = vpack.c.b16 %v270, %v269
    %v286 = vpack.c.b16 %v272, %v271
    %v287 = vpack.c.b16 %v274, %v273
    %v288 = vpack.c.b16 %v276, %v275
    %v289 = vpack.c.b16 %v278, %v277
    %v290 = vpack.c.b16 %v280, %v279
    %v291 = vpack.c.b16 %v282, %v281
    %v292 = vpack.c.b16 %v284, %v283
    %301 = vmatprep.subr.bf16.mxu0 0
    %302 = vmatpush1.bf16.msra.mxu0 %v292
    %303 = vmatprep.subr.bf16.mxu0 0
    %304 = vmatpush1.bf16.msra.mxu0 %v291
    %305 = vmatprep.subr.bf16.mxu0 0
    %306 = vmatpush1.bf16.msra.mxu0 %v290
    %307 = vmatprep.subr.bf16.mxu0 0
    %308 = vmatpush1.bf16.msra.mxu0 %v289
    %309 = vmatprep.subr.bf16.mxu0 0
    %310 = vmatpush1.bf16.msra.mxu0 %v288
    %311 = vmatprep.subr.bf16.mxu0 0
    %312 = vmatpush1.bf16.msra.mxu0 %v287
    %313 = vmatprep.subr.bf16.mxu0 0
    %314 = vmatpush1.bf16.msra.mxu0 %v286
    %315 = vmatprep.subr.bf16.mxu0 0
    %316 = vmatpush1.bf16.msra.mxu0 %v285
    %317 = vmatprep.subr.bf16.mxu0 0
    %318 = vmatpush2.bf16.msra.mxu0 0
    %319 = vmatprep.subr.bf16.mxu0 0
    %320 = vmatpush2.bf16.msra.mxu0 0
    %321 = vmatprep.subr.bf16.mxu0 0
    %322 = vmatpush2.bf16.msra.mxu0 0
    %323 = vmatprep.subr.bf16.mxu0 0
    %324 = vmatpush2.bf16.msra.mxu0 0
    %325 = vmatprep.subr.bf16.mxu0 0
    %326 = vmatpush2.bf16.msra.mxu0 0
    %327 = vmatprep.subr.bf16.mxu0 0
    %328 = vmatpush2.bf16.msra.mxu0 0
    %329 = vmatprep.subr.bf16.mxu0 0
    %330 = vmatpush2.bf16.msra.mxu0 0
    %331 = vmatprep.subr.bf16.mxu0 0
    %332 = vmatpush2.bf16.msra.mxu0 0
    %333 = vmatprep.mubr.bf16.mxu0 0
    %334 = vmatmul.mubr.bf16.gmra.mxu0 %v229
    %v335 = vpop.f32.mrf.mxu0
    %v336 = vadd.f32 %v251, %v335
    %v337 = vpop.f32.mrf.mxu0
    %v338 = vpop.f32.mrf.mxu0
    %v339 = vpop.f32.mrf.mxu0
    %340 = vdwg.mxu0
    %vm341 = vcmask 64512
    %342 = vst.msk [vmem:[#allocation7] sm:$0xff] %vm341, %v336
    // Predicated region
    $region38: #{deep_q_net_forward.1} parent=1 // pred_check
      _
    $region39: #{deep_q_net_forward.1} parent=1 // pred_check_branch
      %344 = sbr.rel (0) target = $region41
    $region40: #{deep_q_net_forward.1} parent=1 // pred_region
      %s346 = ssub.s32 128, 128
      %347 = vsyncadd [#allocation4], %s346
      %s349 = sshll.u32 [#allocation7], 4
      %s350 = int_to_ptr.vmem [resolvable:$true] %s349
      %352 = dma.vmem_to_hbm [thread:$0]  %s350, 128, %s7, [#allocation4]
    $region41: #{deep_q_net_forward.1} parent=1 // pred_fallthru
      _
    // Predicated region
    $region42: #{deep_q_net_forward.1} parent=1 // pred_check
      _
    $region43: #{deep_q_net_forward.1} parent=1 // pred_check_branch
      %354 = sbr.rel (0) target = $region45
    $region44: #{deep_q_net_forward.1} parent=1 // pred_region
      %355 = dma.done [#allocation4], 128
    $region45: #{deep_q_net_forward.1} parent=1 // pred_fallthru
      _
    %356 = vsyncpa [#allocation3], 1
    %357 = vsyncpa [#allocation6], 1
    %358 = vsyncpa [#allocation4], 1

</llo_original>
